<compile_context>
chip_gen: v7x
topology: tpu7x:2x2x1
jax: 0.10.0
libtpu: 0.0.40
codegen_flags: <defaults>
</compile_context>

<pallas_src>
import functools

import jax
import jax.numpy as jnp
from jax import lax
from jax.experimental import pallas as pl
from jax.experimental.pallas import tpu as pltpu


def _round_up(n, m):
    return ((n + m - 1) // m) * m


def _mlp_kernel(x_ref, p_ref, o_ref, *, D, H1, H2, offs):
    o_w1, o_w2, o_b1, o_b2, o_w3, o_b3 = offs

    x = x_ref[...]                                # (TB, D)   native layout
    w1T = p_ref[o_w1:o_w1 + H1, 0:D]              # (H1, D)
    w2T = p_ref[o_w2:o_w2 + H2, 0:H1]             # (H2, H1)
    b1 = p_ref[o_b1:o_b1 + H1, 0:1]               # (H1, 1)   broadcasts over lanes
    b2 = p_ref[o_b2:o_b2 + H2, 0:1]               # (H2, 1)
    w3 = p_ref[o_w3:o_w3 + H2, 0:1]               # (H2, 1)
    b3 = p_ref[o_b3:o_b3 + 1, 0:1]                # (1, 1)

    # Layer 1: contract D (dim 1 of both operands) -> (H1, TB); batch moves onto lanes.
    # The transposition of the (TB, D=16) tile is handled in-kernel (XLU), not by a
    # wrapper-side x.T HBM pass.
    a1 = lax.dot_general(w1T, x, (((1,), (1,)), ((), ())),
                         preferred_element_type=jnp.float32)
    h1 = jnp.maximum(a1 + b1, 0.0)                # (H1, TB)

    # Layer 2: plain MXU matmul, batch stays on lanes.
    h2 = jnp.maximum(jnp.dot(w2T, h1, preferred_element_type=jnp.float32) + b2, 0.0)

    # Layer 3 (H2 -> 1): VPU multiply + sublane (XLU) reduction -> lane-dense (1, TB) row.
    out = jnp.sum(h2 * w3, axis=0, keepdims=True) + b3
    o_ref[...] = out.astype(o_ref.dtype)


def pack_params(params):
    """Pack (w1, b1, w2, b2, w3, b3) into ONE (R, C) f32 buffer (transposed layout).

    Call this ONCE per parameter set (at init / after a parameter update) and reuse
    the result across forward calls -- packing is deliberately NOT in the hot path.
    Segments start at 8-aligned row offsets / column 0 so the in-kernel slices are
    clean sub-tile views; the whole thing is a single input DMA per pallas_call.
    """
    w1, b1, w2, b2, w3, b3 = params
    D, H1 = w1.shape
    H2 = w2.shape[1]
    C = max(D, H1)

    o_w1 = 0
    o_w2 = o_w1 + _round_up(H1, 8)
    o_b1 = o_w2 + _round_up(H2, 8)
    o_b2 = o_b1 + _round_up(H1, 8)
    o_w3 = o_b2 + _round_up(H2, 8)
    o_b3 = o_w3 + _round_up(H2, 8)
    R = o_b3 + 8

    P = jnp.zeros((R, C), jnp.float32)
    P = P.at[o_w1:o_w1 + H1, 0:D].set(jnp.asarray(w1, jnp.float32).T)
    P = P.at[o_w2:o_w2 + H2, 0:H1].set(jnp.asarray(w2, jnp.float32).T)
    P = P.at[o_b1:o_b1 + H1, 0:1].set(jnp.asarray(b1, jnp.float32).reshape(H1, 1))
    P = P.at[o_b2:o_b2 + H2, 0:1].set(jnp.asarray(b2, jnp.float32).reshape(H2, 1))
    P = P.at[o_w3:o_w3 + H2, 0:1].set(jnp.asarray(w3, jnp.float32).reshape(H2, 1))
    P = P.at[o_b3:o_b3 + 1, 0:1].set(jnp.asarray(b3, jnp.float32).reshape(1, 1))
    return {"buf": P,
            "offs": (o_w1, o_w2, o_b1, o_b2, o_w3, o_b3),
            "dims": (D, H1, H2)}


# Tile-size policy: big tiles amortize the ~0.35 us fixed per-grid-step overhead.
# 8192 default / 16384 cap keeps double-buffered x + (32, TB) intermediates well
# inside v7x's 32 MiB default scoped VMEM (v5e/v6e have 128 MiB physical).
_DEFAULT_TB = 8192
_MAX_TB = 16384


def simple_mlp_forward(x, packed, *, block_b=None, dimension_semantics=None):
    """x: (B, input_dim) float32; packed: result of pack_params().

    Returns (B,) float32, matching torch's `net(x).squeeze(1)`.
    """
    P = packed["buf"]
    offs = packed["offs"]
    D, H1, H2 = packed["dims"]
    B, Dx = x.shape
    assert Dx == D, (Dx, D)
    if x.dtype != jnp.float32:
        x = x.astype(jnp.float32)
    R, C = P.shape

    # A single full-batch block (block dims == array dims) is always layout-legal;
    # otherwise the tile is a multiple of 128 and Pallas handles the ragged tail
    # itself (no wrapper-side jnp.pad / x.T -- each would cost an extra HBM pass).
    max_tb = _DEFAULT_TB if block_b is None else min(int(block_b), _MAX_TB)
    if B <= max_tb:
        tb = B
    else:
        tb = max(128, (max_tb // 128) * 128)
    grid = (pl.cdiv(B, tb),)

    kernel = functools.partial(_mlp_kernel, D=D, H1=H1, H2=H2, offs=offs)

    flops = 2 * grid[0] * tb * (D * H1 + H1 * H2 + H2)
    bytes_accessed = (x.size + P.size + B) * 4

    def build(dsem):
        return pl.pallas_call(
            kernel,
            out_shape=jax.ShapeDtypeStruct((1, B), jnp.float32),
            grid_spec=pltpu.PrefetchScalarGridSpec(
                num_scalar_prefetch=0,
                grid=grid,
                in_specs=[
                    pl.BlockSpec((tb, D), lambda i: (i, 0)),   # x tile (native layout), pipelined
                    pl.BlockSpec((R, C), lambda i: (0, 0)),    # packed params, fetched once
                ],
                out_specs=pl.BlockSpec((1, tb), lambda i: (0, i)),  # lane-dense output row
            ),
            compiler_params=pltpu.CompilerParams(dimension_semantics=(dsem,)),
            cost_estimate=pl.CostEstimate(
                flops=flops, transcendentals=0, bytes_accessed=bytes_accessed),
        )

    if dimension_semantics is not None:
        candidates = (dimension_semantics,)
    else:
        # CORE_PARALLEL actually shards the batch grid across v7x's two TensorCores
        # ("parallel" is a codegen no-op). Fall back to ARBITRARY if the current
        # chip/runtime rejects it.
        candidates = tuple(s for s in (getattr(pltpu, "CORE_PARALLEL", None),
                                       getattr(pltpu, "ARBITRARY", "arbitrary"))
                           if s is not None)

    err = None
    for dsem in candidates:
        try:
            out = build(dsem)(x, P)
            return out[0]
        except Exception as e:  # fallback only expected for the CORE_PARALLEL attempt
            err = e
    raise err


def init_params(key, input_dim, h1=32, h2=32):
    """Deterministic init mimicking torch.nn.Linear default U(-1/sqrt(fan_in), +1/sqrt(fan_in))."""
    ks = jax.random.split(key, 6)

    def uniform(k, shape, fan_in):
        bound = 1.0 / jnp.sqrt(jnp.float32(fan_in))
        return jax.random.uniform(k, shape, jnp.float32, -bound, bound)

    w1 = uniform(ks[0], (input_dim, h1), input_dim)
    b1 = uniform(ks[1], (1, h1), input_dim)
    w2 = uniform(ks[2], (h1, h2), h1)
    b2 = uniform(ks[3], (1, h2), h1)
    w3 = uniform(ks[4], (h2, 1), h2)
    b3 = uniform(ks[5], (1, 1), h2)
    return (w1, b1, w2, b2, w3, b3)


if __name__ == "__main__":
    key = jax.random.PRNGKey(0)
    k_param, k_x = jax.random.split(key)

    B, input_dim = 8, 16
    params = init_params(k_param, input_dim, h1=32, h2=32)
    packed = pack_params(params)          # packed ONCE, reused by every forward call

    x = jax.random.normal(k_x, (B, input_dim), dtype=jnp.float32)

    def ref_mlp(xv, ps):
        w1, b1, w2, b2, w3, b3 = ps
        h = jnp.maximum(xv @ w1 + b1, 0.0)
        h = jnp.maximum(h @ w2 + b2, 0.0)
        return (h @ w3 + b3)[:, 0]

    # 1) Tiny batch: single full-batch block, exact f32 path (matches the torch module).
    y = simple_mlp_forward(x, packed)
    jax.block_until_ready(y)
    assert y.shape == (B,), y.shape
    assert jnp.allclose(y, ref_mlp(x, params), atol=1e-5, rtol=1e-5), "single-block mismatch"

    # 2) Larger batch exercising the tiled grid + ragged last block (no wrapper pad/transpose).
    B2 = 192
    x2 = jax.random.normal(jax.random.PRNGKey(1), (B2, input_dim), dtype=jnp.float32)
    y2 = simple_mlp_forward(x2, packed, block_b=128)
    jax.block_until_ready(y2)
    assert y2.shape == (B2,), y2.shape
    assert jnp.allclose(y2, ref_mlp(x2, params), atol=1e-5, rtol=1e-5), "tiled/ragged mismatch"

    print("KERNEL_OK")
</pallas_src>

<mosaic_0001>
module attributes {stable_mosaic.version = 11 : i64} {
  func.func @_mlp_kernel(%arg0: i32, %arg1: memref<8x16xf32, #tpu.memory_space<vmem>>, %arg2: memref<168x32xf32, #tpu.memory_space<vmem>>, %arg3: memref<1x8xf32, #tpu.memory_space<vmem>>) attributes {dimension_semantics = [#tpu.dimension_semantics<core_parallel>], iteration_bounds = array<i64: 1>, scalar_prefetch = 0 : i64, scratch_operands = 0 : i64, tpu.core_type = #tpu.core_type<tc>, window_params = [{transform_indices = @transform_0, window_bounds = array<i64: 8, 16>}, {pipeline_mode = #tpu.pipeline_mode<synchronous>, transform_indices = @transform_1, window_bounds = array<i64: 168, 32>}, {transform_indices = @transform_2, window_bounds = array<i64: 1, 8>}]} {
    %c0 = arith.constant 0 : index
    %c0_0 = arith.constant 0 : index
    %0 = vector.load %arg1[%c0, %c0_0] : memref<8x16xf32, #tpu.memory_space<vmem>>, vector<8x16xf32>
    %c0_1 = arith.constant 0 : index
    %c0_2 = arith.constant 0 : index
    %1 = vector.load %arg2[%c0_1, %c0_2] : memref<168x32xf32, #tpu.memory_space<vmem>>, vector<32x16xf32>
    %c32 = arith.constant 32 : index
    %c0_3 = arith.constant 0 : index
    %2 = vector.load %arg2[%c32, %c0_3] : memref<168x32xf32, #tpu.memory_space<vmem>>, vector<32x32xf32>
    %c64 = arith.constant 64 : index
    %c0_4 = arith.constant 0 : index
    %3 = vector.load %arg2[%c64, %c0_4] : memref<168x32xf32, #tpu.memory_space<vmem>>, vector<32x1xf32>
    %c96 = arith.constant 96 : index
    %c0_5 = arith.constant 0 : index
    %4 = vector.load %arg2[%c96, %c0_5] : memref<168x32xf32, #tpu.memory_space<vmem>>, vector<32x1xf32>
    %c128 = arith.constant 128 : index
    %c0_6 = arith.constant 0 : index
    %5 = vector.load %arg2[%c128, %c0_6] : memref<168x32xf32, #tpu.memory_space<vmem>>, vector<32x1xf32>
    %c160 = arith.constant 160 : index
    %c0_7 = arith.constant 0 : index
    %6 = vector.load %arg2[%c160, %c0_7] : memref<168x32xf32, #tpu.memory_space<vmem>>, vector<1x1xf32>
    %cst = arith.constant dense<0.000000e+00> : vector<32x8xf32>
    %7 = tpu.matmul %1, %0, %cst {dimension_numbers = #tpu.dot_dimension_numbers<[1], [1], [0], [0], [0, 0, 1, 0], [], []>} : vector<32x16xf32>, vector<8x16xf32>, vector<32x8xf32> -> vector<32x8xf32>
    %8 = vector.broadcast %3 : vector<32x1xf32> to vector<32x8xf32>
    %9 = arith.addf %7, %8 : vector<32x8xf32>
    %cst_8 = arith.constant 0.000000e+00 : f32
    %10 = vector.broadcast %cst_8 : f32 to vector<32x8xf32>
    %11 = arith.maximumf %9, %10 : vector<32x8xf32>
    %cst_9 = arith.constant dense<0.000000e+00> : vector<32x8xf32>
    %12 = tpu.matmul %2, %11, %cst_9 {dimension_numbers = #tpu.dot_dimension_numbers<[1], [0], [0], [1], [0, 0, 1, 1], [], []>} : vector<32x32xf32>, vector<32x8xf32>, vector<32x8xf32> -> vector<32x8xf32>
    %13 = vector.broadcast %4 : vector<32x1xf32> to vector<32x8xf32>
    %14 = arith.addf %12, %13 : vector<32x8xf32>
    %cst_10 = arith.constant 0.000000e+00 : f32
    %15 = vector.broadcast %cst_10 : f32 to vector<32x8xf32>
    %16 = arith.maximumf %14, %15 : vector<32x8xf32>
    %17 = vector.broadcast %5 : vector<32x1xf32> to vector<32x8xf32>
    %18 = arith.mulf %16, %17 : vector<32x8xf32>
    %cst_11 = arith.constant dense<0.000000e+00> : vector<8xf32>
    %19 = vector.multi_reduction <add>, %18, %cst_11 [0] : vector<32x8xf32> to vector<8xf32>
    %20 = vector.shape_cast %19 : vector<8xf32> to vector<1x8xf32>
    %21 = vector.broadcast %6 : vector<1x1xf32> to vector<1x8xf32>
    %22 = arith.addf %20, %21 : vector<1x8xf32>
    %c0_12 = arith.constant 0 : index
    %c0_13 = arith.constant 0 : index
    %23 = vector.load %arg3[%c0_12, %c0_13] : memref<1x8xf32, #tpu.memory_space<vmem>>, vector<1x8xf32>
    tpu.vector_store %arg3[%c0_12, %c0_13], %22 {strides = array<i32>} : memref<1x8xf32, #tpu.memory_space<vmem>>, vector<1x8xf32>,
    return
  }
  func.func @transform_0(%arg0: i32) -> (i32, i32) {
    %c0_i32 = arith.constant 0 : i32
    %c0_i32_0 = arith.constant 0 : i32
    return %arg0, %c0_i32 : i32, i32
  }
  func.func @transform_1(%arg0: i32) -> (i32, i32) {
    %c0_i32 = arith.constant 0 : i32
    %c0_i32_0 = arith.constant 0 : i32
    %c0_i32_1 = arith.constant 0 : i32
    return %c0_i32, %c0_i32_0 : i32, i32
  }
  func.func @transform_2(%arg0: i32) -> (i32, i32) {
    %c0_i32 = arith.constant 0 : i32
    %c0_i32_0 = arith.constant 0 : i32
    return %c0_i32, %arg0 : i32, i32
  }
}

module attributes {stable_mosaic.version = 11 : i64} {
  func.func @_mlp_kernel(%arg0: i32, %arg1: memref<8x16xf32, #tpu.memory_space<vmem>>, %arg2: memref<168x32xf32, #tpu.memory_space<vmem>>, %arg3: memref<1x8xf32, #tpu.memory_space<vmem>>) attributes {dimension_semantics = [#tpu.dimension_semantics<arbitrary>], iteration_bounds = array<i64: 1>, scalar_prefetch = 0 : i64, scratch_operands = 0 : i64, tpu.core_type = #tpu.core_type<tc>, window_params = [{transform_indices = @transform_0, window_bounds = array<i64: 8, 16>}, {pipeline_mode = #tpu.pipeline_mode<synchronous>, transform_indices = @transform_1, window_bounds = array<i64: 168, 32>}, {transform_indices = @transform_2, window_bounds = array<i64: 1, 8>}]} {
    %c0 = arith.constant 0 : index
    %c0_0 = arith.constant 0 : index
    %0 = vector.load %arg1[%c0, %c0_0] : memref<8x16xf32, #tpu.memory_space<vmem>>, vector<8x16xf32>
    %c0_1 = arith.constant 0 : index
    %c0_2 = arith.constant 0 : index
    %1 = vector.load %arg2[%c0_1, %c0_2] : memref<168x32xf32, #tpu.memory_space<vmem>>, vector<32x16xf32>
    %c32 = arith.constant 32 : index
    %c0_3 = arith.constant 0 : index
    %2 = vector.load %arg2[%c32, %c0_3] : memref<168x32xf32, #tpu.memory_space<vmem>>, vector<32x32xf32>
    %c64 = arith.constant 64 : index
    %c0_4 = arith.constant 0 : index
    %3 = vector.load %arg2[%c64, %c0_4] : memref<168x32xf32, #tpu.memory_space<vmem>>, vector<32x1xf32>
    %c96 = arith.constant 96 : index
    %c0_5 = arith.constant 0 : index
    %4 = vector.load %arg2[%c96, %c0_5] : memref<168x32xf32, #tpu.memory_space<vmem>>, vector<32x1xf32>
    %c128 = arith.constant 128 : index
    %c0_6 = arith.constant 0 : index
    %5 = vector.load %arg2[%c128, %c0_6] : memref<168x32xf32, #tpu.memory_space<vmem>>, vector<32x1xf32>
    %c160 = arith.constant 160 : index
    %c0_7 = arith.constant 0 : index
    %6 = vector.load %arg2[%c160, %c0_7] : memref<168x32xf32, #tpu.memory_space<vmem>>, vector<1x1xf32>
    %cst = arith.constant dense<0.000000e+00> : vector<32x8xf32>
    %7 = tpu.matmul %1, %0, %cst {dimension_numbers = #tpu.dot_dimension_numbers<[1], [1], [0], [0], [0, 0, 1, 0], [], []>} : vector<32x16xf32>, vector<8x16xf32>, vector<32x8xf32> -> vector<32x8xf32>
    %8 = vector.broadcast %3 : vector<32x1xf32> to vector<32x8xf32>
    %9 = arith.addf %7, %8 : vector<32x8xf32>
    %cst_8 = arith.constant 0.000000e+00 : f32
    %10 = vector.broadcast %cst_8 : f32 to vector<32x8xf32>
    %11 = arith.maximumf %9, %10 : vector<32x8xf32>
    %cst_9 = arith.constant dense<0.000000e+00> : vector<32x8xf32>
    %12 = tpu.matmul %2, %11, %cst_9 {dimension_numbers = #tpu.dot_dimension_numbers<[1], [0], [0], [1], [0, 0, 1, 1], [], []>} : vector<32x32xf32>, vector<32x8xf32>, vector<32x8xf32> -> vector<32x8xf32>
    %13 = vector.broadcast %4 : vector<32x1xf32> to vector<32x8xf32>
    %14 = arith.addf %12, %13 : vector<32x8xf32>
    %cst_10 = arith.constant 0.000000e+00 : f32
    %15 = vector.broadcast %cst_10 : f32 to vector<32x8xf32>
    %16 = arith.maximumf %14, %15 : vector<32x8xf32>
    %17 = vector.broadcast %5 : vector<32x1xf32> to vector<32x8xf32>
    %18 = arith.mulf %16, %17 : vector<32x8xf32>
    %cst_11 = arith.constant dense<0.000000e+00> : vector<8xf32>
    %19 = vector.multi_reduction <add>, %18, %cst_11 [0] : vector<32x8xf32> to vector<8xf32>
    %20 = vector.shape_cast %19 : vector<8xf32> to vector<1x8xf32>
    %21 = vector.broadcast %6 : vector<1x1xf32> to vector<1x8xf32>
    %22 = arith.addf %20, %21 : vector<1x8xf32>
    %c0_12 = arith.constant 0 : index
    %c0_13 = arith.constant 0 : index
    %23 = vector.load %arg3[%c0_12, %c0_13] : memref<1x8xf32, #tpu.memory_space<vmem>>, vector<1x8xf32>
    tpu.vector_store %arg3[%c0_12, %c0_13], %22 {strides = array<i32>} : memref<1x8xf32, #tpu.memory_space<vmem>>, vector<1x8xf32>,
    return
  }
  func.func @transform_0(%arg0: i32) -> (i32, i32) {
    %c0_i32 = arith.constant 0 : i32
    %c0_i32_0 = arith.constant 0 : i32
    return %arg0, %c0_i32 : i32, i32
  }
  func.func @transform_1(%arg0: i32) -> (i32, i32) {
    %c0_i32 = arith.constant 0 : i32
    %c0_i32_0 = arith.constant 0 : i32
    %c0_i32_1 = arith.constant 0 : i32
    return %c0_i32, %c0_i32_0 : i32, i32
  }
  func.func @transform_2(%arg0: i32) -> (i32, i32) {
    %c0_i32 = arith.constant 0 : i32
    %c0_i32_0 = arith.constant 0 : i32
    return %c0_i32, %arg0 : i32, i32
  }
}

</mosaic_0001>

<llo_original>
// kernel: tpu_custom_call.1
$region0: #{tpu_custom_call.1}
  #allocation0 [shape = 'u32[]', space=smem, size = 0x4, offset = 0x4, fixed_abs, tag = 'smem constant byte address 0x4 - core index']
  #allocation1 [shape = 'u32[144,128]{1,0:T(1,128)}', space=vmem, size = 0x12000, scoped, tag = 'internal scratch']
  %s0 = inlined_call_operand.vmem [shape: f32[8,16], index: 0, kind: input, shape index: {}]
  %s1 = inlined_call_operand.vmem [shape: f32[168,32], index: 1, kind: input, shape index: {}]
  %s2 = inlined_call_operand.hbm [shape: f32[1,8], index: 2, kind: output, shape index: {}]
  %s3 = sld [smem:[#allocation0]]
  $region18: #{tpu_custom_call.1} parent=0
    _
  %s5 = ssub.s32 1, %s3
  %s6 = scalar_select 0, %s5, %s3
  $region1: #{tpu_custom_call.1} parent=0
    #allocation2 [shape = 'u8[512]{0}', space=vmem, size = 0x400, scoped, tag = 'output window, operand 0, single buffered']
    #allocation3 [shape = 's32[1]{0}', space=sflag, size = 0x4, scoped, tag = 'scoped memory for tpu_custom_call.1']
    %7 = vsyncpa [#allocation3], 0
    // Predicated region
    $region2: #{tpu_custom_call.1} parent=1 // pred_check
      _
    $region3: #{tpu_custom_call.1} parent=1 // pred_check_branch
      %9 = sbr.rel (0) target = $region5
    $region4: #{tpu_custom_call.1} parent=1 // pred_region
      %p10 = scmp.lt.s32.totalorder %s6, 0
      %s11 = scalar_select %p10, %s6, 0
      %s12 = smul.addr %s11, 8
      %s13 = scalar_lea.vmem %s0, %s12
    $region5: #{tpu_custom_call.1} parent=1 // pred_fallthru
      _
    // Predicated region
    $region6: #{tpu_custom_call.1} parent=1 // pred_check
      _
    $region7: #{tpu_custom_call.1} parent=1 // pred_check_branch
      %15 = sbr.rel (0) target = $region9
    $region8: #{tpu_custom_call.1} parent=1 // pred_region
      _
    $region9: #{tpu_custom_call.1} parent=1 // pred_fallthru
      _
    %p16 = scmp.lt.s32.totalorder %s6, 0
    %s17 = scalar_select %p16, %s6, 0
    %s18 = smul.addr %s17, 8
    %s19 = scalar_lea.vmem %s0, %s18
    %p20 = scmp.lt.s32.totalorder %s6, 0
    %s21 = scalar_select %p20, %s6, 0
    %s22 = smul.addr %s21, 8
    %s23 = scalar_lea.vmem %s0, %s22
    %v24 = vld [vmem:[%s23] sm:$0xff]
    %v25 = vld [vmem:[%s1] sm:$0xff]
    %v26 = vld [vmem:[%s1 + $0x8] sm:$0xff]
    %v27 = vld [vmem:[%s1 + $0x10] sm:$0xff]
    %v28 = vld [vmem:[%s1 + $0x18] sm:$0xff]
    %v29 = vld [vmem:[%s1 + $0x20] sm:$0xff]
    %v30 = vld [vmem:[%s1 + $0x28] sm:$0xff]
    %v31 = vld [vmem:[%s1 + $0x30] sm:$0xff]
    %v32 = vld [vmem:[%s1 + $0x38] sm:$0xff]
    %v33 = vld [vmem:[%s1 + $0x40] sm:$0xff]
    %v34 = vld [vmem:[%s1 + $0x48] sm:$0xff]
    %v35 = vld [vmem:[%s1 + $0x50] sm:$0xff]
    %v36 = vld [vmem:[%s1 + $0x58] sm:$0xff]
    %v37 = vld [vmem:[%s1 + $0x60] sm:$0xff]
    %v38 = vld [vmem:[%s1 + $0x68] sm:$0xff]
    %v39 = vld [vmem:[%s1 + $0x70] sm:$0xff]
    %v40 = vld [vmem:[%s1 + $0x78] sm:$0xff]
    %v41 = vld [vmem:[%s1 + $0x80] sm:$0xff]
    %v42 = vld [vmem:[%s1 + $0x88] sm:$0xff]
    %v43 = vld [vmem:[%s1 + $0x90] sm:$0xff]
    %v44 = vld [vmem:[%s1 + $0x98] sm:$0xff]
    %v45 = vld [vmem:[%s1 + $0xa0] sm:$0x1]
    %47 = vset.pattern.permute.xlu0 0
    %48 = vperm.xlu0 %47, %v33
    %v49 = vpop.permute.xlu0 %48
    %52 = vset.pattern.permute.xlu0 0
    %53 = vperm.xlu0 %52, %v34
    %v54 = vpop.permute.xlu0 %53
    %57 = vset.pattern.permute.xlu0 0
    %58 = vperm.xlu0 %57, %v35
    %v59 = vpop.permute.xlu0 %58
    %62 = vset.pattern.permute.xlu0 0
    %63 = vperm.xlu0 %62, %v36
    %v64 = vpop.permute.xlu0 %63
    %vm66 = vcmask 130048
    %v68 = vsel %vm66, %v25, 0
    %v71 = vsel %vm66, %v26, 0
    %v74 = vsel %vm66, %v27, 0
    %v77 = vsel %vm66, %v28, 0
    %v80 = vsel %vm66, %v24, 0
    %82 = vmatprep.subr.mxu0 0.0
    %83 = vmatpush1.xpose.msra.mxu0 %v80
    %84 = vmatprep.subr.mxu0 0.0
    %85 = vmatpush1.xpose.msra.mxu0 0.0
    %86 = vmatprep.subr.mxu0 0.0
    %87 = vmatpush1.xpose.msra.mxu0 0.0
    %88 = vmatprep.subr.mxu0 0.0
    %89 = vmatpush1.xpose.msra.mxu0 0.0
    %90 = vmatprep.subr.mxu0 0.0
    %91 = vmatpush1.xpose.msra.mxu0 0.0
    %92 = vmatprep.subr.mxu0 0.0
    %93 = vmatpush1.xpose.msra.mxu0 0.0
    %94 = vmatprep.subr.mxu0 0.0
    %95 = vmatpush1.xpose.msra.mxu0 0.0
    %96 = vmatprep.subr.mxu0 0.0
    %97 = vmatpush1.xpose.msra.mxu0 0.0
    %98 = vmatprep.subr.mxu0 0.0
    %99 = vmatpush1.xpose.msra.mxu0 0.0
    %100 = vmatprep.subr.mxu0 0.0
    %101 = vmatpush1.xpose.msra.mxu0 0.0
    %102 = vmatprep.subr.mxu0 0.0
    %103 = vmatpush1.xpose.msra.mxu0 0.0
    %104 = vmatprep.subr.mxu0 0.0
    %105 = vmatpush1.xpose.msra.mxu0 0.0
    %106 = vmatprep.subr.mxu0 0.0
    %107 = vmatpush1.xpose.msra.mxu0 0.0
    %108 = vmatprep.subr.mxu0 0.0
    %109 = vmatpush1.xpose.msra.mxu0 0.0
    %110 = vmatprep.subr.mxu0 0.0
    %111 = vmatpush1.xpose.msra.mxu0 0.0
    %112 = vmatprep.subr.mxu0 0.0
    %113 = vmatpush1.xpose.msra.mxu0 0.0
    %114 = vmatprep.subr.mxu0 0.0
    %115 = vmatpush1.xpose.msra.mxu0 0.0
    %116 = vmatprep.subr.mxu0 0.0
    %117 = vmatpush1.xpose.msra.mxu0 0.0
    %118 = vmatprep.subr.mxu0 0.0
    %119 = vmatpush1.xpose.msra.mxu0 0.0
    %120 = vmatprep.subr.mxu0 0.0
    %121 = vmatpush1.xpose.msra.mxu0 0.0
    %122 = vmatprep.subr.mxu0 0.0
    %123 = vmatpush1.xpose.msra.mxu0 0.0
    %124 = vmatprep.subr.mxu0 0.0
    %125 = vmatpush1.xpose.msra.mxu0 0.0
    %126 = vmatprep.subr.mxu0 0.0
    %127 = vmatpush1.xpose.msra.mxu0 0.0
    %128 = vmatprep.subr.mxu0 0.0
    %129 = vmatpush1.xpose.msra.mxu0 0.0
    %130 = vmatprep.subr.mxu0 0.0
    %131 = vmatpush1.xpose.msra.mxu0 0.0
    %132 = vmatprep.subr.mxu0 0.0
    %133 = vmatpush1.xpose.msra.mxu0 0.0
    %134 = vmatprep.subr.mxu0 0.0
    %135 = vmatpush1.xpose.msra.mxu0 0.0
    %136 = vmatprep.subr.mxu0 0.0
    %137 = vmatpush1.xpose.msra.mxu0 0.0
    %138 = vmatprep.subr.mxu0 0.0
    %139 = vmatpush1.xpose.msra.mxu0 0.0
    %140 = vmatprep.subr.mxu0 0.0
    %141 = vmatpush1.xpose.msra.mxu0 0.0
    %142 = vmatprep.subr.mxu0 0.0
    %143 = vmatpush1.xpose.msra.mxu0 0.0
    %144 = vmatprep.subr.mxu0 0.0
    %145 = vmatpush1.xpose.msra.mxu0 0.0
    %146 = vmatprep.mubr.f32.mxu0 0.0
    %147 = vmatmul.mubr.f32.gmra.mrb[0].mxu0 %v68
    %v148 = vpop.f32.mrb[0].mxu0
    %v149 = vadd.f32 %v49, %v148
    %v150 = vpop.f32.mrb[0].mxu0
    %151 = vmatprep.mubr.f32.mxu0 0.0
    %152 = vmatmul.mubr.f32.gmra.mrb[0].mxu0 %v71
    %v153 = vpop.f32.mrb[0].mxu0
    %v154 = vadd.f32 %v54, %v153
    %v155 = vpop.f32.mrb[0].mxu0
    %156 = vmatprep.mubr.f32.mxu0 0.0
    %157 = vmatmul.mubr.f32.gmra.mrb[0].mxu0 %v74
    %v158 = vpop.f32.mrb[0].mxu0
    %v159 = vadd.f32 %v59, %v158
    %v160 = vpop.f32.mrb[0].mxu0
    %161 = vmatprep.mubr.f32.mxu0 0.0
    %162 = vmatmul.mubr.f32.gmra.mrb[0].mxu0 %v77
    %v163 = vpop.f32.mrb[0].mxu0
    %v164 = vadd.f32 %v64, %v163
    %v165 = vpop.f32.mrb[0].mxu0
    %166 = vdwg.mxu0
    %v167 = vmax.f32 %v149, 0.0
    %v168 = vmax.f32 %v154, 0.0
    %v169 = vmax.f32 %v159, 0.0
    %v170 = vmax.f32 %v164, 0.0
    %172 = vset.pattern.permute.xlu0 0
    %173 = vperm.xlu0 %172, %v37
    %v174 = vpop.permute.xlu0 %173
    %177 = vset.pattern.permute.xlu0 0
    %178 = vperm.xlu0 %177, %v38
    %v179 = vpop.permute.xlu0 %178
    %182 = vset.pattern.permute.xlu0 0
    %183 = vperm.xlu0 %182, %v39
    %v184 = vpop.permute.xlu0 %183
    %187 = vset.pattern.permute.xlu0 0
    %188 = vperm.xlu0 %187, %v40
    %v189 = vpop.permute.xlu0 %188
    %vm191 = vcmask 261120
    %v193 = vsel %vm191, %v29, 0
    %v196 = vsel %vm191, %v30, 0
    %v199 = vsel %vm191, %v31, 0
    %v202 = vsel %vm191, %v32, 0
    %204 = vmatprep.subr.mxu0 0.0
    %205 = vmatpush1.msra.mxu0 %v167
    %206 = vmatprep.subr.mxu0 0.0
    %207 = vmatpush1.msra.mxu0 %v168
    %208 = vmatprep.subr.mxu0 0.0
    %209 = vmatpush1.msra.mxu0 %v169
    %210 = vmatprep.subr.mxu0 0.0
    %211 = vmatpush1.msra.mxu0 %v170
    %212 = vmatprep.subr.mxu0 0.0
    %213 = vmatpush1.msra.mxu0 0.0
    %214 = vmatprep.subr.mxu0 0.0
    %215 = vmatpush1.msra.mxu0 0.0
    %216 = vmatprep.subr.mxu0 0.0
    %217 = vmatpush1.msra.mxu0 0.0
    %218 = vmatprep.subr.mxu0 0.0
    %219 = vmatpush1.msra.mxu0 0.0
    %220 = vmatprep.subr.mxu0 0.0
    %221 = vmatpush1.msra.mxu0 0.0
    %222 = vmatprep.subr.mxu0 0.0
    %223 = vmatpush1.msra.mxu0 0.0
    %224 = vmatprep.subr.mxu0 0.0
    %225 = vmatpush1.msra.mxu0 0.0
    %226 = vmatprep.subr.mxu0 0.0
    %227 = vmatpush1.msra.mxu0 0.0
    %228 = vmatprep.subr.mxu0 0.0
    %229 = vmatpush1.msra.mxu0 0.0
    %230 = vmatprep.subr.mxu0 0.0
    %231 = vmatpush1.msra.mxu0 0.0
    %232 = vmatprep.subr.mxu0 0.0
    %233 = vmatpush1.msra.mxu0 0.0
    %234 = vmatprep.subr.mxu0 0.0
    %235 = vmatpush1.msra.mxu0 0.0
    %236 = vmatprep.subr.mxu0 0.0
    %237 = vmatpush1.msra.mxu0 0.0
    %238 = vmatprep.subr.mxu0 0.0
    %239 = vmatpush1.msra.mxu0 0.0
    %240 = vmatprep.subr.mxu0 0.0
    %241 = vmatpush1.msra.mxu0 0.0
    %242 = vmatprep.subr.mxu0 0.0
    %243 = vmatpush1.msra.mxu0 0.0
    %244 = vmatprep.subr.mxu0 0.0
    %245 = vmatpush1.msra.mxu0 0.0
    %246 = vmatprep.subr.mxu0 0.0
    %247 = vmatpush1.msra.mxu0 0.0
    %248 = vmatprep.subr.mxu0 0.0
    %249 = vmatpush1.msra.mxu0 0.0
    %250 = vmatprep.subr.mxu0 0.0
    %251 = vmatpush1.msra.mxu0 0.0
    %252 = vmatprep.subr.mxu0 0.0
    %253 = vmatpush1.msra.mxu0 0.0
    %254 = vmatprep.subr.mxu0 0.0
    %255 = vmatpush1.msra.mxu0 0.0
    %256 = vmatprep.subr.mxu0 0.0
    %257 = vmatpush1.msra.mxu0 0.0
    %258 = vmatprep.subr.mxu0 0.0
    %259 = vmatpush1.msra.mxu0 0.0
    %260 = vmatprep.subr.mxu0 0.0
    %261 = vmatpush1.msra.mxu0 0.0
    %262 = vmatprep.subr.mxu0 0.0
    %263 = vmatpush1.msra.mxu0 0.0
    %264 = vmatprep.subr.mxu0 0.0
    %265 = vmatpush1.msra.mxu0 0.0
    %266 = vmatprep.subr.mxu0 0.0
    %267 = vmatpush1.msra.mxu0 0.0
    %268 = vmatprep.mubr.f32.mxu0 0.0
    %269 = vmatmul.mubr.f32.gmra.mrb[0].mxu0 %v193
    %v270 = vpop.f32.mrb[0].mxu0
    %v271 = vadd.f32 %v174, %v270
    %v272 = vpop.f32.mrb[0].mxu0
    %273 = vmatprep.mubr.f32.mxu0 0.0
    %274 = vmatmul.mubr.f32.gmra.mrb[0].mxu0 %v196
    %v275 = vpop.f32.mrb[0].mxu0
    %v276 = vadd.f32 %v179, %v275
    %v277 = vpop.f32.mrb[0].mxu0
    %278 = vmatprep.mubr.f32.mxu0 0.0
    %279 = vmatmul.mubr.f32.gmra.mrb[0].mxu0 %v199
    %v280 = vpop.f32.mrb[0].mxu0
    %v281 = vadd.f32 %v184, %v280
    %v282 = vpop.f32.mrb[0].mxu0
    %283 = vmatprep.mubr.f32.mxu0 0.0
    %284 = vmatmul.mubr.f32.gmra.mrb[0].mxu0 %v202
    %v285 = vpop.f32.mrb[0].mxu0
    %v286 = vadd.f32 %v189, %v285
    %v287 = vpop.f32.mrb[0].mxu0
    %288 = vdwg.mxu0
    %v289 = vmax.f32 %v271, 0.0
    %v290 = vmax.f32 %v276, 0.0
    %v291 = vmax.f32 %v281, 0.0
    %v292 = vmax.f32 %v286, 0.0
    %294 = vset.pattern.permute.xlu0 0
    %295 = vperm.xlu0 %294, %v41
    %v296 = vpop.permute.xlu0 %295
    %299 = vset.pattern.permute.xlu0 0
    %300 = vperm.xlu0 %299, %v42
    %v301 = vpop.permute.xlu0 %300
    %304 = vset.pattern.permute.xlu0 0
    %305 = vperm.xlu0 %304, %v43
    %v306 = vpop.permute.xlu0 %305
    %309 = vset.pattern.permute.xlu0 0
    %310 = vperm.xlu0 %309, %v44
    %v311 = vpop.permute.xlu0 %310
    %v313 = vmul.f32 %v289, %v296
    %v314 = vmul.f32 %v290, %v301
    %v315 = vmul.f32 %v291, %v306
    %v316 = vmul.f32 %v292, %v311
    %vm317 = vcmask 64512
    %v318 = vsel %vm317, %v313, 0.0
    %v319 = vsel %vm317, %v314, 0.0
    %v320 = vadd.f32 %v318, %v319
    %v321 = vsel %vm317, %v315, 0.0
    %v322 = vadd.f32 %v320, %v321
    %v323 = vsel %vm317, %v316, 0.0
    %v324 = vadd.f32 %v322, %v323
    %v325 = vrot.slane %v324, 4
    %v326 = vadd.f32 %v324, %v325
    %v327 = vrot.slane %v326, 2
    %v328 = vadd.f32 %v326, %v327
    %v329 = vrot.slane %v328, 1
    %v330 = vadd.f32 %v328, %v329
    %332 = vset.pattern.permute.xlu0 0
    %333 = vperm.xlu0 %332, %v45
    %v334 = vpop.permute.xlu0 %333
    %v336 = vadd.f32 %v330, %v334
    %vm337 = vcmask 57344
    %338 = vst.msk [vmem:[#allocation2] sm:$0x1] %vm337, %v336
    // Predicated region
    $region10: #{tpu_custom_call.1} parent=1 // pred_check
      _
    $region11: #{tpu_custom_call.1} parent=1 // pred_check_branch
      %340 = sbr.rel (0) target = $region13
    $region12: #{tpu_custom_call.1} parent=1 // pred_region
      %s342 = ssub.s32 16, 16
      %343 = vsyncadd [#allocation3], %s342
      %s344 = smul.addr %s6, 16
      %s345 = scalar_lea.hbm %s2, %s344
      %s347 = sshll.u32 [#allocation2], 4
      %s348 = int_to_ptr.vmem [resolvable:$true] %s347
      %350 = dma.vmem_to_hbm [thread:$0]  %s348, 16, %s345, [#allocation3]
    $region13: #{tpu_custom_call.1} parent=1 // pred_fallthru
      _
    // Predicated region
    $region14: #{tpu_custom_call.1} parent=1 // pred_check
      _
    $region15: #{tpu_custom_call.1} parent=1 // pred_check_branch
      %352 = sbr.rel (0) target = $region17
    $region16: #{tpu_custom_call.1} parent=1 // pred_region
      %353 = dma.done [#allocation3], 16
    $region17: #{tpu_custom_call.1} parent=1 // pred_fallthru
      _
    %354 = vsyncpa [#allocation3], 1

// kernel: tpu_custom_call.1
$region0: #{tpu_custom_call.1}
  #allocation0 [shape = 'u32[]', space=smem, size = 0x4, offset = 0x4, fixed_abs, tag = 'smem constant byte address 0x4 - core index']
  #allocation1 [shape = 'u32[144,128]{1,0:T(1,128)}', space=vmem, size = 0x12000, scoped, tag = 'internal scratch']
  %s0 = inlined_call_operand.vmem [shape: f32[8,16], index: 0, kind: input, shape index: {}]
  %s1 = inlined_call_operand.vmem [shape: f32[168,32], index: 1, kind: input, shape index: {}]
  %s2 = inlined_call_operand.hbm [shape: f32[1,8], index: 2, kind: output, shape index: {}]
  %s3 = sld [smem:[#allocation0]]
  $region18: #{tpu_custom_call.1} parent=0
    _
  %s5 = ssub.s32 1, %s3
  %s6 = scalar_select 0, %s5, %s3
  $region1: #{tpu_custom_call.1} parent=0
    #allocation2 [shape = 'u8[512]{0}', space=vmem, size = 0x400, scoped, tag = 'output window, operand 0, single buffered']
    #allocation3 [shape = 's32[1]{0}', space=sflag, size = 0x4, scoped, tag = 'scoped memory for tpu_custom_call.1']
    %7 = vsyncpa [#allocation3], 0
    // Predicated region
    $region2: #{tpu_custom_call.1} parent=1 // pred_check
      _
    $region3: #{tpu_custom_call.1} parent=1 // pred_check_branch
      %9 = sbr.rel (0) target = $region5
    $region4: #{tpu_custom_call.1} parent=1 // pred_region
      _
    $region5: #{tpu_custom_call.1} parent=1 // pred_fallthru
      _
    // Predicated region
    $region6: #{tpu_custom_call.1} parent=1 // pred_check
      _
    $region7: #{tpu_custom_call.1} parent=1 // pred_check_branch
      %11 = sbr.rel (0) target = $region9
    $region8: #{tpu_custom_call.1} parent=1 // pred_region
      _
    $region9: #{tpu_custom_call.1} parent=1 // pred_fallthru
      _
    %v12 = vld [vmem:[%s0] sm:$0xff]
    %v13 = vld [vmem:[%s1] sm:$0xff]
    %v14 = vld [vmem:[%s1 + $0x8] sm:$0xff]
    %v15 = vld [vmem:[%s1 + $0x10] sm:$0xff]
    %v16 = vld [vmem:[%s1 + $0x18] sm:$0xff]
    %v17 = vld [vmem:[%s1 + $0x20] sm:$0xff]
    %v18 = vld [vmem:[%s1 + $0x28] sm:$0xff]
    %v19 = vld [vmem:[%s1 + $0x30] sm:$0xff]
    %v20 = vld [vmem:[%s1 + $0x38] sm:$0xff]
    %v21 = vld [vmem:[%s1 + $0x40] sm:$0xff]
    %v22 = vld [vmem:[%s1 + $0x48] sm:$0xff]
    %v23 = vld [vmem:[%s1 + $0x50] sm:$0xff]
    %v24 = vld [vmem:[%s1 + $0x58] sm:$0xff]
    %v25 = vld [vmem:[%s1 + $0x60] sm:$0xff]
    %v26 = vld [vmem:[%s1 + $0x68] sm:$0xff]
    %v27 = vld [vmem:[%s1 + $0x70] sm:$0xff]
    %v28 = vld [vmem:[%s1 + $0x78] sm:$0xff]
    %v29 = vld [vmem:[%s1 + $0x80] sm:$0xff]
    %v30 = vld [vmem:[%s1 + $0x88] sm:$0xff]
    %v31 = vld [vmem:[%s1 + $0x90] sm:$0xff]
    %v32 = vld [vmem:[%s1 + $0x98] sm:$0xff]
    %v33 = vld [vmem:[%s1 + $0xa0] sm:$0x1]
    %35 = vset.pattern.permute.xlu0 0
    %36 = vperm.xlu0 %35, %v21
    %v37 = vpop.permute.xlu0 %36
    %40 = vset.pattern.permute.xlu0 0
    %41 = vperm.xlu0 %40, %v22
    %v42 = vpop.permute.xlu0 %41
    %45 = vset.pattern.permute.xlu0 0
    %46 = vperm.xlu0 %45, %v23
    %v47 = vpop.permute.xlu0 %46
    %50 = vset.pattern.permute.xlu0 0
    %51 = vperm.xlu0 %50, %v24
    %v52 = vpop.permute.xlu0 %51
    %vm54 = vcmask 130048
    %v56 = vsel %vm54, %v13, 0
    %v59 = vsel %vm54, %v14, 0
    %v62 = vsel %vm54, %v15, 0
    %v65 = vsel %vm54, %v16, 0
    %v68 = vsel %vm54, %v12, 0
    %70 = vmatprep.subr.mxu0 0.0
    %71 = vmatpush1.xpose.msra.mxu0 %v68
    %72 = vmatprep.subr.mxu0 0.0
    %73 = vmatpush1.xpose.msra.mxu0 0.0
    %74 = vmatprep.subr.mxu0 0.0
    %75 = vmatpush1.xpose.msra.mxu0 0.0
    %76 = vmatprep.subr.mxu0 0.0
    %77 = vmatpush1.xpose.msra.mxu0 0.0
    %78 = vmatprep.subr.mxu0 0.0
    %79 = vmatpush1.xpose.msra.mxu0 0.0
    %80 = vmatprep.subr.mxu0 0.0
    %81 = vmatpush1.xpose.msra.mxu0 0.0
    %82 = vmatprep.subr.mxu0 0.0
    %83 = vmatpush1.xpose.msra.mxu0 0.0
    %84 = vmatprep.subr.mxu0 0.0
    %85 = vmatpush1.xpose.msra.mxu0 0.0
    %86 = vmatprep.subr.mxu0 0.0
    %87 = vmatpush1.xpose.msra.mxu0 0.0
    %88 = vmatprep.subr.mxu0 0.0
    %89 = vmatpush1.xpose.msra.mxu0 0.0
    %90 = vmatprep.subr.mxu0 0.0
    %91 = vmatpush1.xpose.msra.mxu0 0.0
    %92 = vmatprep.subr.mxu0 0.0
    %93 = vmatpush1.xpose.msra.mxu0 0.0
    %94 = vmatprep.subr.mxu0 0.0
    %95 = vmatpush1.xpose.msra.mxu0 0.0
    %96 = vmatprep.subr.mxu0 0.0
    %97 = vmatpush1.xpose.msra.mxu0 0.0
    %98 = vmatprep.subr.mxu0 0.0
    %99 = vmatpush1.xpose.msra.mxu0 0.0
    %100 = vmatprep.subr.mxu0 0.0
    %101 = vmatpush1.xpose.msra.mxu0 0.0
    %102 = vmatprep.subr.mxu0 0.0
    %103 = vmatpush1.xpose.msra.mxu0 0.0
    %104 = vmatprep.subr.mxu0 0.0
    %105 = vmatpush1.xpose.msra.mxu0 0.0
    %106 = vmatprep.subr.mxu0 0.0
    %107 = vmatpush1.xpose.msra.mxu0 0.0
    %108 = vmatprep.subr.mxu0 0.0
    %109 = vmatpush1.xpose.msra.mxu0 0.0
    %110 = vmatprep.subr.mxu0 0.0
    %111 = vmatpush1.xpose.msra.mxu0 0.0
    %112 = vmatprep.subr.mxu0 0.0
    %113 = vmatpush1.xpose.msra.mxu0 0.0
    %114 = vmatprep.subr.mxu0 0.0
    %115 = vmatpush1.xpose.msra.mxu0 0.0
    %116 = vmatprep.subr.mxu0 0.0
    %117 = vmatpush1.xpose.msra.mxu0 0.0
    %118 = vmatprep.subr.mxu0 0.0
    %119 = vmatpush1.xpose.msra.mxu0 0.0
    %120 = vmatprep.subr.mxu0 0.0
    %121 = vmatpush1.xpose.msra.mxu0 0.0
    %122 = vmatprep.subr.mxu0 0.0
    %123 = vmatpush1.xpose.msra.mxu0 0.0
    %124 = vmatprep.subr.mxu0 0.0
    %125 = vmatpush1.xpose.msra.mxu0 0.0
    %126 = vmatprep.subr.mxu0 0.0
    %127 = vmatpush1.xpose.msra.mxu0 0.0
    %128 = vmatprep.subr.mxu0 0.0
    %129 = vmatpush1.xpose.msra.mxu0 0.0
    %130 = vmatprep.subr.mxu0 0.0
    %131 = vmatpush1.xpose.msra.mxu0 0.0
    %132 = vmatprep.subr.mxu0 0.0
    %133 = vmatpush1.xpose.msra.mxu0 0.0
    %134 = vmatprep.mubr.f32.mxu0 0.0
    %135 = vmatmul.mubr.f32.gmra.mrb[0].mxu0 %v56
    %v136 = vpop.f32.mrb[0].mxu0
    %v137 = vadd.f32 %v37, %v136
    %v138 = vpop.f32.mrb[0].mxu0
    %139 = vmatprep.mubr.f32.mxu0 0.0
    %140 = vmatmul.mubr.f32.gmra.mrb[0].mxu0 %v59
    %v141 = vpop.f32.mrb[0].mxu0
    %v142 = vadd.f32 %v42, %v141
    %v143 = vpop.f32.mrb[0].mxu0
    %144 = vmatprep.mubr.f32.mxu0 0.0
    %145 = vmatmul.mubr.f32.gmra.mrb[0].mxu0 %v62
    %v146 = vpop.f32.mrb[0].mxu0
    %v147 = vadd.f32 %v47, %v146
    %v148 = vpop.f32.mrb[0].mxu0
    %149 = vmatprep.mubr.f32.mxu0 0.0
    %150 = vmatmul.mubr.f32.gmra.mrb[0].mxu0 %v65
    %v151 = vpop.f32.mrb[0].mxu0
    %v152 = vadd.f32 %v52, %v151
    %v153 = vpop.f32.mrb[0].mxu0
    %154 = vdwg.mxu0
    %v155 = vmax.f32 %v137, 0.0
    %v156 = vmax.f32 %v142, 0.0
    %v157 = vmax.f32 %v147, 0.0
    %v158 = vmax.f32 %v152, 0.0
    %160 = vset.pattern.permute.xlu0 0
    %161 = vperm.xlu0 %160, %v25
    %v162 = vpop.permute.xlu0 %161
    %165 = vset.pattern.permute.xlu0 0
    %166 = vperm.xlu0 %165, %v26
    %v167 = vpop.permute.xlu0 %166
    %170 = vset.pattern.permute.xlu0 0
    %171 = vperm.xlu0 %170, %v27
    %v172 = vpop.permute.xlu0 %171
    %175 = vset.pattern.permute.xlu0 0
    %176 = vperm.xlu0 %175, %v28
    %v177 = vpop.permute.xlu0 %176
    %vm179 = vcmask 261120
    %v181 = vsel %vm179, %v17, 0
    %v184 = vsel %vm179, %v18, 0
    %v187 = vsel %vm179, %v19, 0
    %v190 = vsel %vm179, %v20, 0
    %192 = vmatprep.subr.mxu0 0.0
    %193 = vmatpush1.msra.mxu0 %v155
    %194 = vmatprep.subr.mxu0 0.0
    %195 = vmatpush1.msra.mxu0 %v156
    %196 = vmatprep.subr.mxu0 0.0
    %197 = vmatpush1.msra.mxu0 %v157
    %198 = vmatprep.subr.mxu0 0.0
    %199 = vmatpush1.msra.mxu0 %v158
    %200 = vmatprep.subr.mxu0 0.0
    %201 = vmatpush1.msra.mxu0 0.0
    %202 = vmatprep.subr.mxu0 0.0
    %203 = vmatpush1.msra.mxu0 0.0
    %204 = vmatprep.subr.mxu0 0.0
    %205 = vmatpush1.msra.mxu0 0.0
    %206 = vmatprep.subr.mxu0 0.0
    %207 = vmatpush1.msra.mxu0 0.0
    %208 = vmatprep.subr.mxu0 0.0
    %209 = vmatpush1.msra.mxu0 0.0
    %210 = vmatprep.subr.mxu0 0.0
    %211 = vmatpush1.msra.mxu0 0.0
    %212 = vmatprep.subr.mxu0 0.0
    %213 = vmatpush1.msra.mxu0 0.0
    %214 = vmatprep.subr.mxu0 0.0
    %215 = vmatpush1.msra.mxu0 0.0
    %216 = vmatprep.subr.mxu0 0.0
    %217 = vmatpush1.msra.mxu0 0.0
    %218 = vmatprep.subr.mxu0 0.0
    %219 = vmatpush1.msra.mxu0 0.0
    %220 = vmatprep.subr.mxu0 0.0
    %221 = vmatpush1.msra.mxu0 0.0
    %222 = vmatprep.subr.mxu0 0.0
    %223 = vmatpush1.msra.mxu0 0.0
    %224 = vmatprep.subr.mxu0 0.0
    %225 = vmatpush1.msra.mxu0 0.0
    %226 = vmatprep.subr.mxu0 0.0
    %227 = vmatpush1.msra.mxu0 0.0
    %228 = vmatprep.subr.mxu0 0.0
    %229 = vmatpush1.msra.mxu0 0.0
    %230 = vmatprep.subr.mxu0 0.0
    %231 = vmatpush1.msra.mxu0 0.0
    %232 = vmatprep.subr.mxu0 0.0
    %233 = vmatpush1.msra.mxu0 0.0
    %234 = vmatprep.subr.mxu0 0.0
    %235 = vmatpush1.msra.mxu0 0.0
    %236 = vmatprep.subr.mxu0 0.0
    %237 = vmatpush1.msra.mxu0 0.0
    %238 = vmatprep.subr.mxu0 0.0
    %239 = vmatpush1.msra.mxu0 0.0
    %240 = vmatprep.subr.mxu0 0.0
    %241 = vmatpush1.msra.mxu0 0.0
    %242 = vmatprep.subr.mxu0 0.0
    %243 = vmatpush1.msra.mxu0 0.0
    %244 = vmatprep.subr.mxu0 0.0
    %245 = vmatpush1.msra.mxu0 0.0
    %246 = vmatprep.subr.mxu0 0.0
    %247 = vmatpush1.msra.mxu0 0.0
    %248 = vmatprep.subr.mxu0 0.0
    %249 = vmatpush1.msra.mxu0 0.0
    %250 = vmatprep.subr.mxu0 0.0
    %251 = vmatpush1.msra.mxu0 0.0
    %252 = vmatprep.subr.mxu0 0.0
    %253 = vmatpush1.msra.mxu0 0.0
    %254 = vmatprep.subr.mxu0 0.0
    %255 = vmatpush1.msra.mxu0 0.0
    %256 = vmatprep.mubr.f32.mxu0 0.0
    %257 = vmatmul.mubr.f32.gmra.mrb[0].mxu0 %v181
    %v258 = vpop.f32.mrb[0].mxu0
    %v259 = vadd.f32 %v162, %v258
    %v260 = vpop.f32.mrb[0].mxu0
    %261 = vmatprep.mubr.f32.mxu0 0.0
    %262 = vmatmul.mubr.f32.gmra.mrb[0].mxu0 %v184
    %v263 = vpop.f32.mrb[0].mxu0
    %v264 = vadd.f32 %v167, %v263
    %v265 = vpop.f32.mrb[0].mxu0
    %266 = vmatprep.mubr.f32.mxu0 0.0
    %267 = vmatmul.mubr.f32.gmra.mrb[0].mxu0 %v187
    %v268 = vpop.f32.mrb[0].mxu0
    %v269 = vadd.f32 %v172, %v268
    %v270 = vpop.f32.mrb[0].mxu0
    %271 = vmatprep.mubr.f32.mxu0 0.0
    %272 = vmatmul.mubr.f32.gmra.mrb[0].mxu0 %v190
    %v273 = vpop.f32.mrb[0].mxu0
    %v274 = vadd.f32 %v177, %v273
    %v275 = vpop.f32.mrb[0].mxu0
    %276 = vdwg.mxu0
    %v277 = vmax.f32 %v259, 0.0
    %v278 = vmax.f32 %v264, 0.0
    %v279 = vmax.f32 %v269, 0.0
    %v280 = vmax.f32 %v274, 0.0
    %282 = vset.pattern.permute.xlu0 0
    %283 = vperm.xlu0 %282, %v29
    %v284 = vpop.permute.xlu0 %283
    %287 = vset.pattern.permute.xlu0 0
    %288 = vperm.xlu0 %287, %v30
    %v289 = vpop.permute.xlu0 %288
    %292 = vset.pattern.permute.xlu0 0
    %293 = vperm.xlu0 %292, %v31
    %v294 = vpop.permute.xlu0 %293
    %297 = vset.pattern.permute.xlu0 0
    %298 = vperm.xlu0 %297, %v32
    %v299 = vpop.permute.xlu0 %298
    %v301 = vmul.f32 %v277, %v284
    %v302 = vmul.f32 %v278, %v289
    %v303 = vmul.f32 %v279, %v294
    %v304 = vmul.f32 %v280, %v299
    %vm305 = vcmask 64512
    %v306 = vsel %vm305, %v301, 0.0
    %v307 = vsel %vm305, %v302, 0.0
    %v308 = vadd.f32 %v306, %v307
    %v309 = vsel %vm305, %v303, 0.0
    %v310 = vadd.f32 %v308, %v309
    %v311 = vsel %vm305, %v304, 0.0
    %v312 = vadd.f32 %v310, %v311
    %v313 = vrot.slane %v312, 4
    %v314 = vadd.f32 %v312, %v313
    %v315 = vrot.slane %v314, 2
    %v316 = vadd.f32 %v314, %v315
    %v317 = vrot.slane %v316, 1
    %v318 = vadd.f32 %v316, %v317
    %320 = vset.pattern.permute.xlu0 0
    %321 = vperm.xlu0 %320, %v33
    %v322 = vpop.permute.xlu0 %321
    %v324 = vadd.f32 %v318, %v322
    %vm325 = vcmask 57344
    %326 = vst.msk [vmem:[#allocation2] sm:$0x1] %vm325, %v324
    // Predicated region
    $region10: #{tpu_custom_call.1} parent=1 // pred_check
      _
    $region11: #{tpu_custom_call.1} parent=1 // pred_check_branch
      %328 = sbr.rel (0) target = $region13
    $region12: #{tpu_custom_call.1} parent=1 // pred_region
      %s330 = ssub.s32 16, 16
      %331 = vsyncadd [#allocation3], %s330
      %s333 = sshll.u32 [#allocation2], 4
      %s334 = int_to_ptr.vmem [resolvable:$true] %s333
      %336 = dma.vmem_to_hbm [thread:$0]  %s334, 16, %s2, [#allocation3]
    $region13: #{tpu_custom_call.1} parent=1 // pred_fallthru
      _
    // Predicated region
    $region14: #{tpu_custom_call.1} parent=1 // pred_check
      _
    $region15: #{tpu_custom_call.1} parent=1 // pred_check_branch
      %338 = sbr.rel (0) target = $region17
    $region16: #{tpu_custom_call.1} parent=1 // pred_region
      %339 = dma.done [#allocation3], 16
    $region17: #{tpu_custom_call.1} parent=1 // pred_fallthru
      _
    %340 = vsyncpa [#allocation3], 1

</llo_original>
